<compile_context>
chip_gen: v6e
topology: v6e:2x2x1
jax: 0.10.0
libtpu: 0.0.40
codegen_flags: <defaults>
</compile_context>

<pallas_src>
import functools

import jax
import jax.numpy as jnp
from jax import lax
from jax.experimental import pallas as pl
from jax.experimental.pallas import tpu as pltpu


def _round_up(x, m):
    return (x + m - 1) // m * m


# ---------------------------------------------------------------------------
# pltpu.roll direction probe (np.roll convention: out[i] = x[i - shift]).
# ---------------------------------------------------------------------------
_ROLL_LIKE_NP = None


def _roll_probe_kernel(x_ref, o_ref):
    o_ref[...] = pltpu.roll(x_ref[...], 1, 1)


def _roll_rotates_like_np():
    global _ROLL_LIKE_NP
    if _ROLL_LIKE_NP is None:
        x = jax.lax.broadcasted_iota(jnp.int32, (8, 128), 1)
        out = pl.pallas_call(
            _roll_probe_kernel,
            out_shape=jax.ShapeDtypeStruct((8, 128), jnp.int32),
            grid=(1,),
            in_specs=[pl.BlockSpec((8, 128), lambda i: (0, 0))],
            out_specs=pl.BlockSpec((8, 128), lambda i: (0, 0)),
        )(x)
        v = int(jax.device_get(out)[0, 0])
        if v == 127:      # out[j] = x[j - 1]  -> np.roll convention
            _ROLL_LIKE_NP = True
        elif v == 1:      # out[j] = x[j + 1]  -> opposite convention
            _ROLL_LIKE_NP = False
        else:
            raise RuntimeError(f"unexpected pltpu.roll behaviour (probe value {v})")
    return _ROLL_LIKE_NP


# ---------------------------------------------------------------------------
# Stage 1: the DynamicPositionBias MLP, evaluated once over all distinct
# relative distances (reversed order), in feature-major layout.
# ---------------------------------------------------------------------------
def _layernorm_featmajor(x, g, b):
    """LayerNorm over the feature axis (axis 0 in feature-major layout), eps=1e-5."""
    mu = jnp.mean(x, axis=0, keepdims=True)
    var = jnp.mean((x - mu) ** 2, axis=0, keepdims=True)
    return (x - mu) * jax.lax.rsqrt(var + 1e-5) * g + b


def _dpb_mlp_kernel(*refs, depth, norm, log_distance, n_lanes, d0):
    """refs = (*feature-major param refs, out_ref); out[h, p] = MLP(d0 - p)[h]."""
    out_ref = refs[-1]
    prm = refs[:-1]

    p = jax.lax.broadcasted_iota(jnp.int32, (1, n_lanes), 1)
    q = (d0 - p).astype(jnp.float32)                 # lane p holds distance d0 - p
    if log_distance:
        q = jnp.sign(q) * jnp.log(jnp.abs(q) + 1.0)

    k = 0
    # Linear(1, dim): K == 1, broadcasted outer product -> stays on the VPU.
    x = q * prm[k][...] + prm[k + 1][...]            # (dim, n_lanes)
    k += 2
    if norm:
        x = _layernorm_featmajor(x, prm[k][...], prm[k + 1][...])
        k += 2
    x = x * jax.nn.sigmoid(x)                        # SiLU

    for _ in range(depth - 1):                       # hidden Linear(dim, dim) on MXU
        x = jnp.dot(prm[k][...], x, preferred_element_type=jnp.float32) + prm[k + 1][...]
        k += 2
        if norm:
            x = _layernorm_featmajor(x, prm[k][...], prm[k + 1][...])
            k += 2
        x = x * jax.nn.sigmoid(x)

    # Final Linear(dim, heads) -> (heads, n_lanes) already in head-major layout.
    out_ref[...] = jnp.dot(prm[k][...], x, preferred_element_type=jnp.float32) + prm[k + 1][...]


# ---------------------------------------------------------------------------
# Stage 2: tiled sliding-window copy -> lane-dense (heads, n, n) bias.
# tbl[h, s, m] = MLP(s - m + c_off), so the group of rows r0..r0+group-1 of a
# tile is ONE uniform lane window of tbl: one roll + one full-slab store.
# ---------------------------------------------------------------------------
def _dpb_gather_kernel(t_ref, out_ref, *, n, heads, tile_rows, group, c_off,
                       w_lanes, roll_like_np):
    i0 = pl.program_id(0) * tile_rows
    n_groups = tile_rows // group

    for h in range(heads):                           # small, static
        def body(g, carry):
            r0 = pl.multiple_of(g * group, group)
            off = c_off - i0 - r0                    # left-rotate amount (>= 0)
            shift = (-off if roll_like_np else off) % w_lanes
            plane = t_ref[h]                         # (group, w_lanes) f32, VMEM
            rolled = pltpu.roll(plane, shift, 1)     # rolled[s, j] = plane[s, j + off]
            out_ref[h, pl.ds(r0, group), :] = rolled[:, :n].astype(out_ref.dtype)
            return carry
        lax.fori_loop(0, n_groups, body, 0)


# ---------------------------------------------------------------------------
# Parameter plumbing
# ---------------------------------------------------------------------------
def _transpose_params(params, depth, norm):
    """Original (torch-like) layout -> feature-major (transposed) layout."""
    tp, k = [], 0
    for _ in range(depth):
        w, b = params[k], params[k + 1]
        k += 2
        tp += [w.T, b.T]                             # (in,out)->(out,in), (1,out)->(out,1)
        if norm:
            g, beta = params[k], params[k + 1]
            k += 2
            tp += [g.T, beta.T]
    wf, bf = params[k], params[k + 1]
    tp += [wf.T, bf.T]                               # (dim,heads)->(heads,dim)
    return tp


def init_dpb_params(key, dim, heads, depth, norm=False):
    """Deterministic init matching the shapes of the PyTorch module."""
    params = []
    keys = jax.random.split(key, 2 * (depth + 1))
    ki = 0

    def linear(kw, kb, fan_in, fan_out):
        bound = 1.0 / jnp.sqrt(float(fan_in))
        w = jax.random.uniform(kw, (fan_in, fan_out), jnp.float32, -bound, bound)
        b = jax.random.uniform(kb, (1, fan_out), jnp.float32, -bound, bound)
        return w, b

    w, b = linear(keys[ki], keys[ki + 1], 1, dim)
    ki += 2
    params += [w, b]
    if norm:
        params += [jnp.ones((1, dim), jnp.float32), jnp.zeros((1, dim), jnp.float32)]
    for _ in range(depth - 1):
        w, b = linear(keys[ki], keys[ki + 1], dim, dim)
        ki += 2
        params += [w, b]
        if norm:
            params += [jnp.ones((1, dim), jnp.float32), jnp.zeros((1, dim), jnp.float32)]
    w, b = linear(keys[ki], keys[ki + 1], dim, heads)
    params += [w, b]
    return params


def _pick_tile_rows(n_pad, heads, n, out_itemsize, group,
                    target_block_bytes=8 * 1024 * 1024, max_rows=512):
    """VMEM-aware: largest multiple-of-`group` divisor of n_pad whose
    (heads, rows, n) output block is ~target_block_bytes (double-buffer safe
    under a 48 MiB scoped-VMEM limit on v5e/v6e/v7x)."""
    row_bytes = max(1, heads * n * out_itemsize)
    cap = min(max_rows, n_pad, max(group, target_block_bytes // row_bytes))
    cap = max(group, (cap // group) * group)
    best = group
    for t in range(group, cap + 1, group):
        if n_pad % t == 0:
            best = t
    return best


# ---------------------------------------------------------------------------
# Public wrapper
# ---------------------------------------------------------------------------
def dynamic_position_bias(i, j, params, *, dim, heads, depth,
                          log_distance=False, norm=False,
                          out_dtype=jnp.float32, tile_rows=None):
    assert i == j, "DynamicPositionBias requires i == j"
    n = int(j)
    out_dtype = jnp.dtype(out_dtype)
    group = (8 * 4) // out_dtype.itemsize            # 8 rows (f32) / 16 rows (bf16)
    n_pad = _round_up(n, group)                      # padded row count
    w = n + n_pad - group                            # lane window actually used
    w_lanes = _round_up(w, 128)
    n_dist = _round_up(group - 1 + w_lanes, 128)     # lanes for the MLP table
    c_off = n_pad - group

    roll_like_np = _roll_rotates_like_np()

    # -- stage 1: vt[h, p] = MLP(n_pad - 1 - p), computed once (Pallas, MXU) --
    tparams = _transpose_params(params, depth, norm)
    mlp_kernel = functools.partial(
        _dpb_mlp_kernel, depth=depth, norm=norm, log_distance=log_distance,
        n_lanes=n_dist, d0=n_pad - 1)
    vt = pl.pallas_call(
        mlp_kernel,
        out_shape=jax.ShapeDtypeStruct((heads, n_dist), jnp.float32),
        grid=(1,),
        in_specs=[pl.BlockSpec(p.shape, lambda t: (0, 0)) for p in tparams],
        out_specs=pl.BlockSpec((heads, n_dist), lambda t: (0, 0)),
        compiler_params=pltpu.CompilerParams(
            dimension_semantics=("arbitrary",),
            vmem_limit_bytes=48 * 1024 * 1024),
    )(*tparams)

    # -- stage 2 prep: sublane-staggered table (tiny, pure layout, XLA) --
    # tbl[h, s, m] = vt[h, (group-1-s) + m] = MLP(s - m + c_off)
    tbl = jnp.stack(
        [vt[:, group - 1 - s: group - 1 - s + w_lanes] for s in range(group)],
        axis=1)                                      # (heads, group, w_lanes) f32

    # -- stage 2: tiled layout kernel (HBM-writeback bound) --
    if tile_rows is None:
        tile_rows = _pick_tile_rows(n_pad, heads, n, out_dtype.itemsize, group)
    assert tile_rows % group == 0 and n_pad % tile_rows == 0

    gather_kernel = functools.partial(
        _dpb_gather_kernel, n=n, heads=heads, tile_rows=tile_rows, group=group,
        c_off=c_off, w_lanes=w_lanes, roll_like_np=roll_like_np)
    out = pl.pallas_call(
        gather_kernel,
        out_shape=jax.ShapeDtypeStruct((heads, n_pad, n), out_dtype),
        grid=(n_pad // tile_rows,),
        in_specs=[pl.BlockSpec((heads, group, w_lanes), lambda t: (0, 0, 0))],
        out_specs=pl.BlockSpec((heads, tile_rows, n), lambda t: (0, t, 0)),
        compiler_params=pltpu.CompilerParams(
            dimension_semantics=("parallel",),
            vmem_limit_bytes=48 * 1024 * 1024),
    )(tbl)

    if n_pad != n:                                   # rare padded-rows path
        out = out[:, :n, :]
    return out                                       # (heads, n, n) -- 'h i j'


# ---------------------------------------------------------------------------
# Pure-JAX reference (mirrors the PyTorch module) for correctness checking.
# ---------------------------------------------------------------------------
def dynamic_position_bias_ref(i, j, params, *, dim, heads, depth,
                              log_distance=False, norm=False):
    assert i == j
    n = j
    hp = jax.lax.Precision.HIGHEST
    pos = jnp.arange(-n + 1, n, dtype=jnp.float32).reshape(-1, 1)
    if log_distance:
        pos = jnp.sign(pos) * jnp.log(jnp.abs(pos) + 1.0)
    x = pos
    k = 0
    for _ in range(depth):
        w, b = params[k], params[k + 1]
        k += 2
        x = jnp.dot(x, w, precision=hp) + b
        if norm:
            g, beta = params[k], params[k + 1]
            k += 2
            mu = jnp.mean(x, axis=-1, keepdims=True)
            var = jnp.mean((x - mu) ** 2, axis=-1, keepdims=True)
            x = (x - mu) / jnp.sqrt(var + 1e-5) * g + beta
        x = x * jax.nn.sigmoid(x)
    wf, bf = params[k], params[k + 1]
    rel = jnp.dot(x, wf, precision=hp) + bf          # (2n-1, heads)
    seq = jnp.arange(n)
    indices = seq[:, None] - seq[None, :] + (n - 1)
    return rel[indices].transpose(2, 0, 1)           # (heads, n, n)


if __name__ == "__main__":
    key = jax.random.PRNGKey(0)

    # AdjTransformerEncoder defaults: dim=192, head_size=32 -> num_heads=6,
    # DynamicPositionBias(dim=192//4=48, heads=6, depth=2).
    heads, dpb_dim, depth = 6, 48, 2
    n = 128                                          # small sequence length

    # case 1: module defaults (log_distance=False, norm=False), f32, 4 grid steps
    params = init_dpb_params(key, dpb_dim, heads, depth, norm=False)
    ref = dynamic_position_bias_ref(n, n, params, dim=dpb_dim, heads=heads, depth=depth)
    out = jax.block_until_ready(dynamic_position_bias(
        n, n, params, dim=dpb_dim, heads=heads, depth=depth, tile_rows=32))
    assert out.shape == (heads, n, n), out.shape
    assert jnp.allclose(out, ref, atol=5e-3, rtol=5e-3), "mismatch (default config)"

    # case 2: log_distance + LayerNorm, n not a multiple of 8 (padded-rows path)
    n2 = 20
    params2 = init_dpb_params(key, dpb_dim, heads, depth, norm=True)
    ref2 = dynamic_position_bias_ref(n2, n2, params2, dim=dpb_dim, heads=heads,
                                     depth=depth, log_distance=True, norm=True)
    out2 = jax.block_until_ready(dynamic_position_bias(
        n2, n2, params2, dim=dpb_dim, heads=heads, depth=depth,
        log_distance=True, norm=True))
    assert out2.shape == (heads, n2, n2), out2.shape
    assert jnp.allclose(out2, ref2, atol=5e-3, rtol=5e-3), "mismatch (log+norm config)"

    # case 3: bfloat16 output (halves the HBM writeback; 16-row groups)
    out3 = jax.block_until_ready(dynamic_position_bias(
        n, n, params, dim=dpb_dim, heads=heads, depth=depth,
        out_dtype=jnp.bfloat16, tile_rows=32))
    assert out3.dtype == jnp.bfloat16 and out3.shape == (heads, n, n)
    assert jnp.allclose(out3.astype(jnp.float32), ref, atol=3e-2, rtol=3e-2), \
        "mismatch (bf16 output)"

    print("KERNEL_OK")
</pallas_src>

<mosaic_0001>
module attributes {stable_mosaic.version = 11 : i64} {
  func.func @_roll_probe_kernel(%arg0: i32, %arg1: memref<8x128xi32, #tpu.memory_space<vmem>>, %arg2: memref<8x128xi32, #tpu.memory_space<vmem>>) attributes {dimension_semantics = [#tpu.dimension_semantics<arbitrary>], iteration_bounds = array<i64: 1>, scalar_prefetch = 0 : i64, scratch_operands = 0 : i64, tpu.core_type = #tpu.core_type<tc>, window_params = [{pipeline_mode = #tpu.pipeline_mode<synchronous>, transform_indices = @transform_0, window_bounds = array<i64: 8, 128>}, {pipeline_mode = #tpu.pipeline_mode<synchronous>, transform_indices = @transform_1, window_bounds = array<i64: 8, 128>}]} {
    %c0 = arith.constant 0 : index
    %c0_0 = arith.constant 0 : index
    %0 = vector.load %arg1[%c0, %c0_0] : memref<8x128xi32, #tpu.memory_space<vmem>>, vector<8x128xi32>
    %c1_i32 = arith.constant 1 : i32
    %1 = tpu.dynamic_rotate %0 by %c1_i32 dim 1 : vector<8x128xi32>, i32 -> vector<8x128xi32>
    %c0_1 = arith.constant 0 : index
    %c0_2 = arith.constant 0 : index
    %2 = vector.load %arg2[%c0_1, %c0_2] : memref<8x128xi32, #tpu.memory_space<vmem>>, vector<8x128xi32>
    tpu.vector_store %arg2[%c0_1, %c0_2], %1 {strides = array<i32>} : memref<8x128xi32, #tpu.memory_space<vmem>>, vector<8x128xi32>,
    return
  }
  func.func @transform_0(%arg0: i32) -> (i32, i32) {
    %c0_i32 = arith.constant 0 : i32
    %c0_i32_0 = arith.constant 0 : i32
    %c0_i32_1 = arith.constant 0 : i32
    return %c0_i32, %c0_i32_0 : i32, i32
  }
  func.func @transform_1(%arg0: i32) -> (i32, i32) {
    %c0_i32 = arith.constant 0 : i32
    %c0_i32_0 = arith.constant 0 : i32
    %c0_i32_1 = arith.constant 0 : i32
    return %c0_i32, %c0_i32_0 : i32, i32
  }
}

</mosaic_0001>

<llo_original>
// kernel: tpu_custom_call.1
$region0: #{tpu_custom_call.1}
  #allocation0 [shape = 'u32[]', space=smem, size = 0x4, offset = 0x4, fixed_abs, tag = 'smem constant byte address 0x4 - core index']
  #allocation1 [shape = 'u32[144,128]{1,0:T(1,128)}', space=vmem, size = 0x12000, scoped, tag = 'internal scratch']
  %s0 = inlined_call_operand.hbm [shape: s32[8,128], index: 0, kind: input, shape index: {}]
  %s1 = inlined_call_operand.hbm [shape: s32[8,128], index: 1, kind: output, shape index: {}]
  %s2 = sld [smem:[#allocation0]]
  $region18: #{tpu_custom_call.1} parent=0
    _
  %s4 = ssub.s32 1, %s2
  %s5 = scalar_select 0, %s4, %s2
  $region1: #{tpu_custom_call.1} parent=0
    #allocation2 [shape = 'u8[4096]{0}', space=vmem, size = 0x1000, scoped, tag = 'input window, operand 0, single buffered']
    #allocation3 [shape = 's32[1]{0}', space=sflag, size = 0x4, scoped, tag = 'scoped memory for tpu_custom_call.1']
    #allocation4 [shape = 's32[1]{0}', space=sflag, size = 0x4, scoped, tag = 'scoped memory for tpu_custom_call.1']
    #allocation5 [shape = 'u8[4096]{0}', space=vmem, size = 0x1000, scoped, tag = 'output window, operand 0, single buffered']
    %6 = vsyncpa [#allocation3], 0
    %7 = vsyncpa [#allocation4], 0
    // Predicated region
    $region2: #{tpu_custom_call.1} parent=1 // pred_check
      _
    $region3: #{tpu_custom_call.1} parent=1 // pred_check_branch
      %9 = sbr.rel (0) target = $region5
    $region4: #{tpu_custom_call.1} parent=1 // pred_region
      %s11 = ssub.s32 128, 128
      %12 = vsyncadd [#allocation3], %s11
      %s14 = sshll.u32 [#allocation2], 4
      %s15 = int_to_ptr.vmem [resolvable:$true] %s14
      %17 = dma.hbm_to_vmem [thread:$0]  %s0, 128, %s15, [#allocation3]
    $region5: #{tpu_custom_call.1} parent=1 // pred_fallthru
      _
    // Predicated region
    $region6: #{tpu_custom_call.1} parent=1 // pred_check
      _
    $region7: #{tpu_custom_call.1} parent=1 // pred_check_branch
      %19 = sbr.rel (0) target = $region9
    $region8: #{tpu_custom_call.1} parent=1 // pred_region
      %20 = dma.done [#allocation3], 128
    $region9: #{tpu_custom_call.1} parent=1 // pred_fallthru
      _
    %v21 = vld [vmem:[#allocation2] sm:$0xff]
    %22 = vrot.lane.b32.xlu0 %v21, 1
    %v23 = vpop.permute.xlu0 %22
    %24 = vst [vmem:[#allocation5] sm:$0xff] %v23
    // Predicated region
    $region10: #{tpu_custom_call.1} parent=1 // pred_check
      _
    $region11: #{tpu_custom_call.1} parent=1 // pred_check_branch
      %26 = sbr.rel (0) target = $region13
    $region12: #{tpu_custom_call.1} parent=1 // pred_region
      %s28 = ssub.s32 128, 128
      %29 = vsyncadd [#allocation4], %s28
      %s31 = sshll.u32 [#allocation5], 4
      %s32 = int_to_ptr.vmem [resolvable:$true] %s31
      %34 = dma.vmem_to_hbm [thread:$0]  %s32, 128, %s1, [#allocation4]
    $region13: #{tpu_custom_call.1} parent=1 // pred_fallthru
      _
    // Predicated region
    $region14: #{tpu_custom_call.1} parent=1 // pred_check
      _
    $region15: #{tpu_custom_call.1} parent=1 // pred_check_branch
      %36 = sbr.rel (0) target = $region17
    $region16: #{tpu_custom_call.1} parent=1 // pred_region
      %37 = dma.done [#allocation4], 128
    $region17: #{tpu_custom_call.1} parent=1 // pred_fallthru
      _
    %38 = vsyncpa [#allocation3], 1
    %39 = vsyncpa [#allocation4], 1

</llo_original>
